<compile_context>
chip_gen: v7x
topology: tpu7x:2x2x1
jax: 0.10.0
libtpu: 0.0.40
codegen_flags: <defaults>
</compile_context>

<pallas_src>
import jax
import jax.numpy as jnp
from jax.experimental import pallas as pl
from jax.experimental.pallas import tpu as pltpu


def fcn_kernel(x_ref, w1_ref, b1_ref, w2_ref, b2_ref, o_ref):
    x = x_ref[...]                                                     # (TB, I)

    # Hidden layer: x @ W1 (pre-transposed to (I, H)) + b1, ReLU.  Plain NN
    # contraction -> MXU, no in-kernel transpose of the resident weight.
    h = jnp.dot(x, w1_ref[...], preferred_element_type=jnp.float32)   # (TB, H)
    h = jnp.maximum(h + b1_ref[...], 0.0)                             # bcast (1, H)

    # Output layer: h @ W2 (pre-transposed to (H, O)) + b2, Sigmoid.
    y = jnp.dot(h, w2_ref[...], preferred_element_type=jnp.float32)   # (TB, O)
    y = y + b2_ref[...]                                                # bcast (1, O)

    # Sigmoid: exp on EUP; approx reciprocal = single EUP vrcp (no VPU divide /
    # Newton refinement).  exp overflow for very negative y -> inf -> 1/inf = 0
    # (correct limit, no NaN).
    z = jnp.exp(-y)
    o_ref[...] = pl.reciprocal(1.0 + z, approx=True).astype(o_ref.dtype)


def _round_up(x, m):
    return (x + m - 1) // m * m


def prepare_fcn_params(w1, b1, w2, b2):
    """One-time transform of PyTorch-layout Linear params into kernel layout.

    w1: (H, I), b1: (H,), w2: (O, H), b2: (O,)   (PyTorch (out, in) layout)
    Returns (w1_t (I, H), b1_r (1, H), w2_t (H, O), b2_r (1, O)) in f32.
    Call once per model and reuse across forward calls.
    """
    f32 = jnp.float32
    w1_t = jnp.asarray(w1, f32).T
    b1_r = jnp.asarray(b1, f32).reshape(1, -1)
    w2_t = jnp.asarray(w2, f32).T
    b2_r = jnp.asarray(b2, f32).reshape(1, -1)
    return w1_t, b1_r, w2_t, b2_r


def fcn_forward(x, w1_t, b1_r, w2_t, b2_r, *, block_b=256):
    """x: (B, I); remaining args from prepare_fcn_params (already transposed)."""
    B, I = x.shape
    I_w, H = w1_t.shape
    H_w, O = w2_t.shape
    assert I_w == I and H_w == H and b1_r.shape == (1, H) and b2_r.shape == (1, O)

    # Batch tile: multiple of 8 sublanes (or == full batch).  block_b default 256
    # fills the MXU M dimension on v6e/v7x (2x128 on v5e).  No batch padding:
    # ragged last tiles are handled by Pallas (OOB output rows are dropped).
    block_b = _round_up(block_b, 8)
    TB = min(block_b, B)
    if TB == B and B >= 512:
        # v7x megacore: keep >= 2 iterations on the "parallel" batch axis.
        TB = _round_up(pl.cdiv(B, 2), 8)
    grid_b = pl.cdiv(B, TB)

    f32 = jnp.float32
    x = x.astype(f32)

    cost = pl.CostEstimate(
        flops=2 * B * (I * H + H * O),
        transcendentals=B * O,
        bytes_accessed=4 * (B * I + I * H + H + H * O + O + B * O),
    )

    return pl.pallas_call(
        fcn_kernel,
        out_shape=jax.ShapeDtypeStruct((B, O), f32),
        grid=(grid_b,),
        in_specs=[
            pl.BlockSpec((TB, I), lambda i: (i, 0)),   # x: tiled over batch
            pl.BlockSpec((I, H), lambda i: (0, 0)),    # W1^T: grid-invariant, resident
            pl.BlockSpec((1, H), lambda i: (0, 0)),    # b1
            pl.BlockSpec((H, O), lambda i: (0, 0)),    # W2^T
            pl.BlockSpec((1, O), lambda i: (0, 0)),    # b2
        ],
        out_specs=pl.BlockSpec((TB, O), lambda i: (i, 0)),
        compiler_params=pltpu.CompilerParams(
            dimension_semantics=("parallel",)),
        cost_estimate=cost,
    )(x, w1_t, b1_r, w2_t, b2_r)


def fcn_reference(x, w1, b1, w2, b2):
    h = jnp.maximum(x @ w1.T + b1, 0.0)
    return jax.nn.sigmoid(h @ w2.T + b2)


if __name__ == "__main__":
    # XOR-style FCN: input_size=2, hidden_size=32, output_size=1, batch=8.
    B, I, H, O = 8, 2, 32, 1

    key = jax.random.PRNGKey(0)
    kx, k1, k2, k3, k4 = jax.random.split(key, 5)

    x = jax.random.normal(kx, (B, I), dtype=jnp.float32)
    # Deterministic parameter init (synthetic; not a checkpoint load).
    w1 = jax.random.normal(k1, (H, I), dtype=jnp.float32) * 0.5   # Linear1 weight (out, in)
    b1 = jax.random.normal(k2, (H,), dtype=jnp.float32) * 0.1     # Linear1 bias
    w2 = jax.random.normal(k3, (O, H), dtype=jnp.float32) * 0.5   # Linear2 weight (out, in)
    b2 = jax.random.normal(k4, (O,), dtype=jnp.float32) * 0.1     # Linear2 bias

    # Hoisted one-time param prep (transpose + reshape); reused across calls.
    params = prepare_fcn_params(w1, b1, w2, b2)
    fwd = jax.jit(fcn_forward)

    y = fwd(x, *params)
    jax.block_until_ready(y)

    y_ref = fcn_reference(x, w1, b1, w2, b2)
    assert y.shape == (B, O)
    # approx=True reciprocal in the sigmoid -> ~1e-4 abs error budget.
    assert jnp.allclose(y, y_ref, atol=1e-3, rtol=1e-3)

    print("KERNEL_OK")
</pallas_src>

<mosaic_0001>
module attributes {stable_mosaic.version = 11 : i64} {
  func.func @fcn_kernel(%arg0: i32, %arg1: memref<8x2xf32, #tpu.memory_space<vmem>>, %arg2: memref<2x32xf32, #tpu.memory_space<vmem>>, %arg3: memref<1x32xf32, #tpu.memory_space<vmem>>, %arg4: memref<32x1xf32, #tpu.memory_space<vmem>>, %arg5: memref<1x1xf32, #tpu.memory_space<vmem>>, %arg6: memref<8x1xf32, #tpu.memory_space<vmem>>) attributes {dimension_semantics = [#tpu.dimension_semantics<parallel>], iteration_bounds = array<i64: 1>, scalar_prefetch = 0 : i64, scratch_operands = 0 : i64, tpu.core_type = #tpu.core_type<tc>, window_params = [{transform_indices = @transform_0, window_bounds = array<i64: 8, 2>}, {pipeline_mode = #tpu.pipeline_mode<synchronous>, transform_indices = @transform_1, window_bounds = array<i64: 2, 32>}, {pipeline_mode = #tpu.pipeline_mode<synchronous>, transform_indices = @transform_2, window_bounds = array<i64: 1, 32>}, {pipeline_mode = #tpu.pipeline_mode<synchronous>, transform_indices = @transform_3, window_bounds = array<i64: 32, 1>}, {pipeline_mode = #tpu.pipeline_mode<synchronous>, transform_indices = @transform_4, window_bounds = array<i64: 1, 1>}, {transform_indices = @transform_5, window_bounds = array<i64: 8, 1>}]} {
    %c0 = arith.constant 0 : index
    %c0_0 = arith.constant 0 : index
    %0 = vector.load %arg1[%c0, %c0_0] : memref<8x2xf32, #tpu.memory_space<vmem>>, vector<8x2xf32>
    %c0_1 = arith.constant 0 : index
    %c0_2 = arith.constant 0 : index
    %1 = vector.load %arg2[%c0_1, %c0_2] : memref<2x32xf32, #tpu.memory_space<vmem>>, vector<2x32xf32>
    %cst = arith.constant dense<0.000000e+00> : vector<8x32xf32>
    %2 = tpu.matmul %0, %1, %cst {dimension_numbers = #tpu.dot_dimension_numbers<[1], [0], [0], [1], [0, 0, 1, 1], [], []>} : vector<8x2xf32>, vector<2x32xf32>, vector<8x32xf32> -> vector<8x32xf32>
    %c0_3 = arith.constant 0 : index
    %c0_4 = arith.constant 0 : index
    %3 = vector.load %arg3[%c0_3, %c0_4] : memref<1x32xf32, #tpu.memory_space<vmem>>, vector<1x32xf32>
    %4 = vector.broadcast %3 : vector<1x32xf32> to vector<8x32xf32>
    %5 = arith.addf %2, %4 : vector<8x32xf32>
    %cst_5 = arith.constant 0.000000e+00 : f32
    %6 = vector.broadcast %cst_5 : f32 to vector<8x32xf32>
    %7 = arith.maximumf %5, %6 : vector<8x32xf32>
    %c0_6 = arith.constant 0 : index
    %c0_7 = arith.constant 0 : index
    %8 = vector.load %arg4[%c0_6, %c0_7] : memref<32x1xf32, #tpu.memory_space<vmem>>, vector<32x1xf32>
    %cst_8 = arith.constant dense<0.000000e+00> : vector<8x1xf32>
    %9 = tpu.matmul %7, %8, %cst_8 {dimension_numbers = #tpu.dot_dimension_numbers<[1], [0], [0], [1], [0, 0, 1, 1], [], []>} : vector<8x32xf32>, vector<32x1xf32>, vector<8x1xf32> -> vector<8x1xf32>
    %c0_9 = arith.constant 0 : index
    %c0_10 = arith.constant 0 : index
    %10 = vector.load %arg5[%c0_9, %c0_10] : memref<1x1xf32, #tpu.memory_space<vmem>>, vector<1x1xf32>
    %11 = vector.broadcast %10 : vector<1x1xf32> to vector<8x1xf32>
    %12 = arith.addf %9, %11 : vector<8x1xf32>
    %cst_11 = arith.constant 0.000000e+00 : f32
    %13 = vector.broadcast %cst_11 : f32 to vector<8x1xf32>
    %14 = arith.subf %13, %12 : vector<8x1xf32>
    %15 = math.exp %14 : vector<8x1xf32>
    %cst_12 = arith.constant 1.000000e+00 : f32
    %16 = vector.broadcast %cst_12 : f32 to vector<8x1xf32>
    %17 = arith.addf %16, %15 : vector<8x1xf32>
    %18 = tpu.reciprocal %17 {approx = true} : vector<8x1xf32> -> vector<8x1xf32>
    %c0_13 = arith.constant 0 : index
    %c0_14 = arith.constant 0 : index
    %19 = vector.load %arg6[%c0_13, %c0_14] : memref<8x1xf32, #tpu.memory_space<vmem>>, vector<8x1xf32>
    tpu.vector_store %arg6[%c0_13, %c0_14], %18 {strides = array<i32>} : memref<8x1xf32, #tpu.memory_space<vmem>>, vector<8x1xf32>,
    return
  }
  func.func @transform_0(%arg0: i32) -> (i32, i32) {
    %c0_i32 = arith.constant 0 : i32
    %c0_i32_0 = arith.constant 0 : i32
    return %arg0, %c0_i32 : i32, i32
  }
  func.func @transform_1(%arg0: i32) -> (i32, i32) {
    %c0_i32 = arith.constant 0 : i32
    %c0_i32_0 = arith.constant 0 : i32
    %c0_i32_1 = arith.constant 0 : i32
    return %c0_i32, %c0_i32_0 : i32, i32
  }
  func.func @transform_2(%arg0: i32) -> (i32, i32) {
    %c0_i32 = arith.constant 0 : i32
    %c0_i32_0 = arith.constant 0 : i32
    %c0_i32_1 = arith.constant 0 : i32
    return %c0_i32, %c0_i32_0 : i32, i32
  }
  func.func @transform_3(%arg0: i32) -> (i32, i32) {
    %c0_i32 = arith.constant 0 : i32
    %c0_i32_0 = arith.constant 0 : i32
    %c0_i32_1 = arith.constant 0 : i32
    return %c0_i32, %c0_i32_0 : i32, i32
  }
  func.func @transform_4(%arg0: i32) -> (i32, i32) {
    %c0_i32 = arith.constant 0 : i32
    %c0_i32_0 = arith.constant 0 : i32
    %c0_i32_1 = arith.constant 0 : i32
    return %c0_i32, %c0_i32_0 : i32, i32
  }
  func.func @transform_5(%arg0: i32) -> (i32, i32) {
    %c0_i32 = arith.constant 0 : i32
    %c0_i32_0 = arith.constant 0 : i32
    return %arg0, %c0_i32 : i32, i32
  }
}

</mosaic_0001>

<llo_original>
// kernel: fcn_forward.1
$region0: #{fcn_forward.1}
  #allocation0 [shape = 'u32[]', space=smem, size = 0x4, offset = 0x4, fixed_abs, tag = 'smem constant byte address 0x4 - core index']
  #allocation1 [shape = 'u32[144,128]{1,0:T(1,128)}', space=vmem, size = 0x12000, scoped, tag = 'internal scratch']
  #allocation2 [shape = 'f32[1,1]{1,0:T(1,128)S(1)}', space=vmem, size = 0x200, scoped, tag = 'scoped memory for fcn_forward.1']
  %s0 = inlined_call_operand.vmem [shape: f32[8,2], index: 0, kind: input, shape index: {}]
  %s1 = inlined_call_operand.vmem [shape: f32[2,32], index: 1, kind: input, shape index: {}]
  %s2 = inlined_call_operand.vmem [shape: f32[1,32], index: 2, kind: input, shape index: {}]
  %s3 = inlined_call_operand.vmem [shape: f32[32,1], index: 3, kind: input, shape index: {}]
  %s4 = inlined_call_operand.<no memory space> [shape: f32[1,1], index: 4, kind: input, shape index: {}]
  %s5 = inlined_call_operand.vmem [shape: f32[8,1], index: 5, kind: output, shape index: {}]
  %s6 = sld [smem:[#allocation0]]
  $region30: #{fcn_forward.1} parent=0
    _
  %s8 = ssub.s32 1, %s6
  %s9 = scalar_select 0, %s8, %s6
  %v10 = vstv %s4
  %11 = vst [vmem:[#allocation2] sm:$0x1] %v10
  // Predicated region
  $region2: #{fcn_forward.1} parent=0 // pred_check
    _
  $region3: #{fcn_forward.1} parent=0 // pred_check_branch
    %13 = sbr.rel (0) target = $region5
  $region4: #{fcn_forward.1} parent=0 // pred_region
    _
  $region5: #{fcn_forward.1} parent=0 // pred_fallthru
    _
  // Predicated region
  $region6: #{fcn_forward.1} parent=0 // pred_check
    _
  $region7: #{fcn_forward.1} parent=0 // pred_check_branch
    %15 = sbr.rel (0) target = $region9
  $region8: #{fcn_forward.1} parent=0 // pred_region
    _
  $region9: #{fcn_forward.1} parent=0 // pred_fallthru
    _
  // Predicated region
  $region10: #{fcn_forward.1} parent=0 // pred_check
    _
  $region11: #{fcn_forward.1} parent=0 // pred_check_branch
    %17 = sbr.rel (0) target = $region13
  $region12: #{fcn_forward.1} parent=0 // pred_region
    _
  $region13: #{fcn_forward.1} parent=0 // pred_fallthru
    _
  // Predicated region
  $region14: #{fcn_forward.1} parent=0 // pred_check
    _
  $region15: #{fcn_forward.1} parent=0 // pred_check_branch
    %19 = sbr.rel (0) target = $region17
  $region16: #{fcn_forward.1} parent=0 // pred_region
    _
  $region17: #{fcn_forward.1} parent=0 // pred_fallthru
    _
  // Predicated region
  $region18: #{fcn_forward.1} parent=0 // pred_check
    _
  $region19: #{fcn_forward.1} parent=0 // pred_check_branch
    %21 = sbr.rel (0) target = $region21
  $region20: #{fcn_forward.1} parent=0 // pred_region
    _
  $region21: #{fcn_forward.1} parent=0 // pred_fallthru
    _
  %v22 = vld [vmem:[%s0] sm:$0xff]
  %v23 = vld [vmem:[%s1] sm:$0x3]
  %v24 = vld [vmem:[%s2] sm:$0x1]
  %v26 = vlaneseq
  %v27 = vshrl.u32 %v26, 7
  %v28 = vsub.s32 0, %v27
  %v29 = vrot.slane %v24, %v28
  %vm31 = vcmask 15360
  %v33 = vsel %vm31, %v22, 0
  %vm35 = vcmask 1041408
  %v37 = vsel %vm35, %v23, 0
  %39 = vmatprep.subr.mxu0 0.0
  %40 = vmatpush1.msra.mxu0 %v37
  %41 = vmatprep.subr.mxu0 0.0
  %42 = vmatpush1.msra.mxu0 0.0
  %43 = vmatprep.subr.mxu0 0.0
  %44 = vmatpush1.msra.mxu0 0.0
  %45 = vmatprep.subr.mxu0 0.0
  %46 = vmatpush1.msra.mxu0 0.0
  %47 = vmatprep.subr.mxu0 0.0
  %48 = vmatpush1.msra.mxu0 0.0
  %49 = vmatprep.subr.mxu0 0.0
  %50 = vmatpush1.msra.mxu0 0.0
  %51 = vmatprep.subr.mxu0 0.0
  %52 = vmatpush1.msra.mxu0 0.0
  %53 = vmatprep.subr.mxu0 0.0
  %54 = vmatpush1.msra.mxu0 0.0
  %55 = vmatprep.subr.mxu0 0.0
  %56 = vmatpush1.msra.mxu0 0.0
  %57 = vmatprep.subr.mxu0 0.0
  %58 = vmatpush1.msra.mxu0 0.0
  %59 = vmatprep.subr.mxu0 0.0
  %60 = vmatpush1.msra.mxu0 0.0
  %61 = vmatprep.subr.mxu0 0.0
  %62 = vmatpush1.msra.mxu0 0.0
  %63 = vmatprep.subr.mxu0 0.0
  %64 = vmatpush1.msra.mxu0 0.0
  %65 = vmatprep.subr.mxu0 0.0
  %66 = vmatpush1.msra.mxu0 0.0
  %67 = vmatprep.subr.mxu0 0.0
  %68 = vmatpush1.msra.mxu0 0.0
  %69 = vmatprep.subr.mxu0 0.0
  %70 = vmatpush1.msra.mxu0 0.0
  %71 = vmatprep.subr.mxu0 0.0
  %72 = vmatpush1.msra.mxu0 0.0
  %73 = vmatprep.subr.mxu0 0.0
  %74 = vmatpush1.msra.mxu0 0.0
  %75 = vmatprep.subr.mxu0 0.0
  %76 = vmatpush1.msra.mxu0 0.0
  %77 = vmatprep.subr.mxu0 0.0
  %78 = vmatpush1.msra.mxu0 0.0
  %79 = vmatprep.subr.mxu0 0.0
  %80 = vmatpush1.msra.mxu0 0.0
  %81 = vmatprep.subr.mxu0 0.0
  %82 = vmatpush1.msra.mxu0 0.0
  %83 = vmatprep.subr.mxu0 0.0
  %84 = vmatpush1.msra.mxu0 0.0
  %85 = vmatprep.subr.mxu0 0.0
  %86 = vmatpush1.msra.mxu0 0.0
  %87 = vmatprep.subr.mxu0 0.0
  %88 = vmatpush1.msra.mxu0 0.0
  %89 = vmatprep.subr.mxu0 0.0
  %90 = vmatpush1.msra.mxu0 0.0
  %91 = vmatprep.subr.mxu0 0.0
  %92 = vmatpush1.msra.mxu0 0.0
  %93 = vmatprep.subr.mxu0 0.0
  %94 = vmatpush1.msra.mxu0 0.0
  %95 = vmatprep.subr.mxu0 0.0
  %96 = vmatpush1.msra.mxu0 0.0
  %97 = vmatprep.subr.mxu0 0.0
  %98 = vmatpush1.msra.mxu0 0.0
  %99 = vmatprep.subr.mxu0 0.0
  %100 = vmatpush1.msra.mxu0 0.0
  %101 = vmatprep.subr.mxu0 0.0
  %102 = vmatpush1.msra.mxu0 0.0
  %103 = vmatprep.mubr.f32.mxu0 0.0
  %104 = vmatmul.mubr.f32.gmra.mrb[0].mxu0 %v33
  %v105 = vpop.f32.mrb[0].mxu0
  %v106 = vadd.f32 %v29, %v105
  %v107 = vpop.f32.mrb[0].mxu0
  %108 = vdwg.mxu0
  %v109 = vmax.f32 %v106, 0.0
  %v110 = vld [vmem:[%s3] sm:$0xff]
  %v111 = vld [vmem:[%s3 + $0x8] sm:$0xff]
  %v112 = vld [vmem:[%s3 + $0x10] sm:$0xff]
  %v113 = vld [vmem:[%s3 + $0x18] sm:$0xff]
  %v114 = vld [vmem:[#allocation2] sm:$0x1]
  %v116 = vlaneseq
  %v117 = vshrl.u32 %v116, 7
  %v118 = vsub.s32 0, %v117
  %v119 = vrot.slane %v114, %v118
  %vm121 = vcmask 261120
  %v123 = vsel %vm121, %v109, 0
  %125 = vmatprep.subr.mxu0 0.0
  %126 = vmatpush1.msra.mxu0 %v110
  %127 = vmatprep.subr.mxu0 0.0
  %128 = vmatpush1.msra.mxu0 %v111
  %129 = vmatprep.subr.mxu0 0.0
  %130 = vmatpush1.msra.mxu0 %v112
  %131 = vmatprep.subr.mxu0 0.0
  %132 = vmatpush1.msra.mxu0 %v113
  %133 = vmatprep.subr.mxu0 0.0
  %134 = vmatpush1.msra.mxu0 0.0
  %135 = vmatprep.subr.mxu0 0.0
  %136 = vmatpush1.msra.mxu0 0.0
  %137 = vmatprep.subr.mxu0 0.0
  %138 = vmatpush1.msra.mxu0 0.0
  %139 = vmatprep.subr.mxu0 0.0
  %140 = vmatpush1.msra.mxu0 0.0
  %141 = vmatprep.subr.mxu0 0.0
  %142 = vmatpush1.msra.mxu0 0.0
  %143 = vmatprep.subr.mxu0 0.0
  %144 = vmatpush1.msra.mxu0 0.0
  %145 = vmatprep.subr.mxu0 0.0
  %146 = vmatpush1.msra.mxu0 0.0
  %147 = vmatprep.subr.mxu0 0.0
  %148 = vmatpush1.msra.mxu0 0.0
  %149 = vmatprep.subr.mxu0 0.0
  %150 = vmatpush1.msra.mxu0 0.0
  %151 = vmatprep.subr.mxu0 0.0
  %152 = vmatpush1.msra.mxu0 0.0
  %153 = vmatprep.subr.mxu0 0.0
  %154 = vmatpush1.msra.mxu0 0.0
  %155 = vmatprep.subr.mxu0 0.0
  %156 = vmatpush1.msra.mxu0 0.0
  %157 = vmatprep.subr.mxu0 0.0
  %158 = vmatpush1.msra.mxu0 0.0
  %159 = vmatprep.subr.mxu0 0.0
  %160 = vmatpush1.msra.mxu0 0.0
  %161 = vmatprep.subr.mxu0 0.0
  %162 = vmatpush1.msra.mxu0 0.0
  %163 = vmatprep.subr.mxu0 0.0
  %164 = vmatpush1.msra.mxu0 0.0
  %165 = vmatprep.subr.mxu0 0.0
  %166 = vmatpush1.msra.mxu0 0.0
  %167 = vmatprep.subr.mxu0 0.0
  %168 = vmatpush1.msra.mxu0 0.0
  %169 = vmatprep.subr.mxu0 0.0
  %170 = vmatpush1.msra.mxu0 0.0
  %171 = vmatprep.subr.mxu0 0.0
  %172 = vmatpush1.msra.mxu0 0.0
  %173 = vmatprep.subr.mxu0 0.0
  %174 = vmatpush1.msra.mxu0 0.0
  %175 = vmatprep.subr.mxu0 0.0
  %176 = vmatpush1.msra.mxu0 0.0
  %177 = vmatprep.subr.mxu0 0.0
  %178 = vmatpush1.msra.mxu0 0.0
  %179 = vmatprep.subr.mxu0 0.0
  %180 = vmatpush1.msra.mxu0 0.0
  %181 = vmatprep.subr.mxu0 0.0
  %182 = vmatpush1.msra.mxu0 0.0
  %183 = vmatprep.subr.mxu0 0.0
  %184 = vmatpush1.msra.mxu0 0.0
  %185 = vmatprep.subr.mxu0 0.0
  %186 = vmatpush1.msra.mxu0 0.0
  %187 = vmatprep.subr.mxu0 0.0
  %188 = vmatpush1.msra.mxu0 0.0
  %189 = vmatprep.mubr.f32.mxu0 0.0
  %190 = vmatmul.mubr.f32.gmra.mrb[0].mxu0 %v123
  %v191 = vpop.f32.mrb[0].mxu0
  %v192 = vadd.f32 %v119, %v191
  %v193 = vpop.f32.mrb[0].mxu0
  %194 = vdwg.mxu0
  %v195 = vsub.f32 0.0, %v192
  %v196 = vmul.f32 %v195, 1.442695
  %v197 = vpow.pop %v196
  %v198 = vadd.f32 %v197, 1.0
  %v199 = vrcp.pop %v198
  %vm200 = vcmask 7168
  %201 = vst.msk [vmem:[%s5] sm:$0xff] %vm200, %v199
  // Predicated region
  $region22: #{fcn_forward.1} parent=0 // pred_check
    _
  $region23: #{fcn_forward.1} parent=0 // pred_check_branch
    %203 = sbr.rel (0) target = $region25
  $region24: #{fcn_forward.1} parent=0 // pred_region
    _
  $region25: #{fcn_forward.1} parent=0 // pred_fallthru
    _
  // Predicated region
  $region26: #{fcn_forward.1} parent=0 // pred_check
    _
  $region27: #{fcn_forward.1} parent=0 // pred_check_branch
    %205 = sbr.rel (0) target = $region29
  $region28: #{fcn_forward.1} parent=0 // pred_region
    _
  $region29: #{fcn_forward.1} parent=0 // pred_fallthru
    _

</llo_original>
